<compile_context>
chip_gen: v6e
topology: v6e:2x2x1
jax: 0.10.0
libtpu: 0.0.40
codegen_flags: <defaults>
</compile_context>

<pallas_src>
import functools

import jax
import jax.numpy as jnp
from jax.experimental import pallas as pl
from jax.experimental.pallas import tpu as pltpu


def _mlp_attn_kernel(q_ref, k_ref, v_ref, w_ref, b_ref, out_ref,
                     *maybe_weight_ref, d_split, exact_softmax):
    """One grid step processes a block of `bb` batch elements.

    q_ref: (bb, Lq, Dq)   k_ref: (bb, Lk, Dk)   v_ref: (bb, Lk, Dv)
    w_ref: (Dq+Dk, A) packed [Wq; Wk]   b_ref: (2, A) packed [bq; bk] (f32)
    out_ref: (bb, Lq, Dv) ; optional weight_ref: (bb, Lq, Lk)
    """
    cdt = q_ref.dtype                          # MXU compute dtype
    bb, Lq, Dq = q_ref.shape
    _, Lk, Dk = k_ref.shape
    A = w_ref.shape[1]

    # Parameters loaded once per grid step.
    w = w_ref[...]                             # (Dq+Dk, A) cdt
    b = b_ref[...]                             # (2, A) f32
    wq, wk = w[:d_split], w[d_split:]
    bq, bk = b[0:1], b[1:2]

    # Batched projections: fold the batch into the MXU M-dimension.
    # (bb*Lq, Dq) @ (Dq, A)  and  (bb*Lk, Dk) @ (Dk, A), f32 accumulation,
    # single f32 bias add on the stacked result.
    q2d = q_ref[...].reshape(bb * Lq, Dq)
    k2d = k_ref[...].reshape(bb * Lk, Dk)
    q_proj = (jax.lax.dot_general(q2d, wq, (((1,), (0,)), ((), ())),
                                  preferred_element_type=jnp.float32)
              + bq).reshape(bb, Lq, A)          # (bb, Lq, A) f32
    k_proj = (jax.lax.dot_general(k2d, wk, (((1,), (0,)), ((), ())),
                                  preferred_element_type=jnp.float32)
              + bk).reshape(bb, Lk, A)          # (bb, Lk, A) f32

    # scores = q' @ k'^T : batched contraction on the feature axis
    # (no materialized transpose), f32 accumulate.
    scores = jnp.einsum("bqa,bka->bqk",
                        q_proj.astype(cdt), k_proj.astype(cdt),
                        preferred_element_type=jnp.float32)   # (bb, Lq, Lk) f32

    # Numerically stable softmax in f32.
    m = jnp.max(scores, axis=-1, keepdims=True)
    e = jnp.exp(scores - m)
    denom = jnp.sum(e, axis=-1, keepdims=True)
    if exact_softmax:
        weight = e / denom                                   # module-exact
    else:
        weight = e * pl.reciprocal(denom, approx=True)       # EUP slot (bf16 path)

    # out = weight @ v : batched contraction, f32 accumulate.
    attn = jnp.einsum("bqk,bkd->bqd", weight.astype(cdt), v_ref[...],
                      preferred_element_type=jnp.float32)    # (bb, Lq, Dv) f32

    out_ref[...] = attn.astype(out_ref.dtype)
    if maybe_weight_ref:
        # NOTE: in the bf16 opt-in path the stored weight is the f32 softmax,
        # while weight@v used bf16-cast operands (documented deviation).
        maybe_weight_ref[0][...] = weight.astype(maybe_weight_ref[0].dtype)


@functools.partial(jax.jit, static_argnames=("return_weight", "compute_dtype"))
def mlp_attention(q, k, v, wq, bq, wk, bk, *, return_weight=True,
                  compute_dtype=jnp.float32):
    B, Lq, Dq = q.shape
    _, Lk, Dk = k.shape
    _, _, Dv = v.shape
    A = wq.shape[1]
    out_dtype = q.dtype
    cdt = jnp.dtype(compute_dtype)
    exact_softmax = bool(cdt == jnp.dtype(jnp.float32))

    # Cast MXU operands once in the wrapper; pack parameters to cut the DMA
    # descriptor count (7 -> 5 input transfers). Biases stay f32 and are added
    # to the f32 MXU accumulator.
    q = q.astype(cdt)
    k = k.astype(cdt)
    v = v.astype(cdt)
    w_packed = jnp.concatenate([wq.astype(cdt), wk.astype(cdt)], axis=0)  # (Dq+Dk, A)
    b_packed = jnp.concatenate([bq.reshape(1, A).astype(jnp.float32),
                                bk.reshape(1, A).astype(jnp.float32)],
                               axis=0)                                    # (2, A)

    # Generation-aware VMEM budget (v5e/v6e: 128 MiB, v7x: 64 MiB physical).
    try:
        vmem_cap = int(pltpu.get_tpu_info().vmem_capacity_bytes)
    except Exception:
        vmem_cap = 64 * 1024 * 1024            # conservative (v7x) fallback
    budget = int(0.85 * vmem_cap)

    c_isz = jnp.dtype(cdt).itemsize
    o_isz = jnp.dtype(out_dtype).itemsize
    param_bytes = (Dq + Dk) * A * c_isz + 2 * A * 4

    def vmem_estimate(bb):
        io = (bb * (Lq * Dq + Lk * Dk + Lk * Dv) * c_isz     # q/k/v blocks
              + bb * Lq * Dv * o_isz                          # output block
              + (bb * Lq * Lk * o_isz if return_weight else 0)
              + param_bytes)
        io *= 2                                               # double-buffering
        # f32 intermediates: q_proj, k_proj, (scores, e, weight), attn
        interm = 4 * bb * (Lq * A + Lk * A + 3 * Lq * Lk + Lq * Dv)
        return io + interm

    # Batch-block choice: whole batch in one grid step if it fits (best for
    # single-TC v5e/v6e and avoids ~0.35us/step overhead); otherwise the
    # smallest power-of-two split (2 steps feed both v7x TensorCores).
    bb, steps = B, 1
    while bb > 1 and vmem_estimate(bb) > budget:
        steps *= 2
        bb = -(-B // steps)
    grid_steps = -(-B // bb)
    grid = (grid_steps,)

    vmem_limit = int(min(budget, max(32 * 1024 * 1024, 2 * vmem_estimate(bb))))

    # Invariant parameter blocks: skip double-buffering when the grid iterates.
    if grid_steps > 1:
        param_spec = lambda shape: pl.BlockSpec(shape, lambda i: (0, 0),
                                                pipeline_mode=pl.Buffered(1))
    else:
        param_spec = lambda shape: pl.BlockSpec(shape, lambda i: (0, 0))

    in_specs = [
        pl.BlockSpec((bb, Lq, Dq), lambda i: (i, 0, 0)),   # q
        pl.BlockSpec((bb, Lk, Dk), lambda i: (i, 0, 0)),   # k
        pl.BlockSpec((bb, Lk, Dv), lambda i: (i, 0, 0)),   # v
        param_spec((Dq + Dk, A)),                          # [Wq; Wk]
        param_spec((2, A)),                                # [bq; bk]
    ]

    out_shape = [jax.ShapeDtypeStruct((B, Lq, Dv), out_dtype)]
    out_specs = [pl.BlockSpec((bb, Lq, Dv), lambda i: (i, 0, 0))]
    if return_weight:
        out_shape.append(jax.ShapeDtypeStruct((B, Lq, Lk), out_dtype))
        out_specs.append(pl.BlockSpec((bb, Lq, Lk), lambda i: (i, 0, 0)))

    grid_spec = pltpu.PrefetchScalarGridSpec(
        num_scalar_prefetch=0,
        grid=grid,
        in_specs=in_specs,
        out_specs=out_specs,
    )

    kernel = functools.partial(_mlp_attn_kernel, d_split=Dq,
                               exact_softmax=exact_softmax)

    res = pl.pallas_call(
        kernel,
        out_shape=out_shape,
        grid_spec=grid_spec,
        compiler_params=pltpu.CompilerParams(
            dimension_semantics=("parallel",),
            vmem_limit_bytes=vmem_limit),
    )(q, k, v, w_packed, b_packed)

    if return_weight:
        return res[0], res[1]
    return res[0]


def _ref(q, k, v, wq, bq, wk, bk):
    """Pure-JAX f32 reference mirroring the PyTorch module forward."""
    hp = jax.lax.Precision.HIGHEST
    qp = jnp.einsum("bld,da->bla", q, wq, precision=hp) + bq
    kp = jnp.einsum("bld,da->bla", k, wk, precision=hp) + bk
    scores = jnp.einsum("bqa,bka->bqk", qp, kp, precision=hp)
    weight = jax.nn.softmax(scores, axis=-1)
    attn = jnp.einsum("bqk,bkd->bqd", weight, v, precision=hp)
    return attn, weight


if __name__ == "__main__":
    # Small shapes consistent with the module's forward.
    B, Lq, Lk = 2, 8, 8
    q_size, k_size, attn_size, v_size = 32, 32, 32, 32

    key = jax.random.PRNGKey(0)
    kq, kk, kv, kwq, kbq, kwk, kbk = jax.random.split(key, 7)

    q = jax.random.normal(kq, (B, Lq, q_size), dtype=jnp.float32)
    k = jax.random.normal(kk, (B, Lk, k_size), dtype=jnp.float32)
    v = jax.random.normal(kv, (B, Lk, v_size), dtype=jnp.float32)

    # Deterministic parameter init (PyTorch-Linear-style uniform bounds).
    bound_q = 1.0 / (q_size ** 0.5)
    bound_k = 1.0 / (k_size ** 0.5)
    wq = jax.random.uniform(kwq, (q_size, attn_size), jnp.float32, -bound_q, bound_q)
    bq = jax.random.uniform(kbq, (1, attn_size), jnp.float32, -bound_q, bound_q)
    wk = jax.random.uniform(kwk, (k_size, attn_size), jnp.float32, -bound_k, bound_k)
    bk = jax.random.uniform(kbk, (1, attn_size), jnp.float32, -bound_k, bound_k)

    # Default path: float32 compute -> module-exact numerics.
    attn_val, weight = mlp_attention(q, k, v, wq, bq, wk, bk)
    jax.block_until_ready((attn_val, weight))

    assert attn_val.shape == (B, Lq, v_size)
    assert weight.shape == (B, Lq, Lk)

    ref_val, ref_w = _ref(q, k, v, wq, bq, wk, bk)
    assert jnp.allclose(attn_val, ref_val, atol=1e-4, rtol=1e-4)
    assert jnp.allclose(weight, ref_w, atol=1e-4, rtol=1e-4)

    # Weights-off fast path (skips the O(Lq*Lk) HBM writeback).
    attn_only = mlp_attention(q, k, v, wq, bq, wk, bk, return_weight=False)
    jax.block_until_ready(attn_only)
    assert jnp.allclose(attn_only, attn_val, atol=1e-6, rtol=1e-6)

    # Opt-in bf16 MXU-operand path (f32 accumulation), looser tolerance.
    attn_bf16, w_bf16 = mlp_attention(q, k, v, wq, bq, wk, bk,
                                      compute_dtype=jnp.bfloat16)
    jax.block_until_ready((attn_bf16, w_bf16))
    assert jnp.allclose(attn_bf16, ref_val, atol=5e-2, rtol=5e-2)

    print("KERNEL_OK")
</pallas_src>

<mosaic_0001>
module attributes {stable_mosaic.version = 11 : i64} {
  func.func @_mlp_attn_kernel(%arg0: i32, %arg1: memref<2x8x32xf32, #tpu.memory_space<vmem>>, %arg2: memref<2x8x32xf32, #tpu.memory_space<vmem>>, %arg3: memref<2x8x32xf32, #tpu.memory_space<vmem>>, %arg4: memref<64x32xf32, #tpu.memory_space<vmem>>, %arg5: memref<2x32xf32, #tpu.memory_space<vmem>>, %arg6: memref<2x8x32xf32, #tpu.memory_space<vmem>>, %arg7: memref<2x8x8xf32, #tpu.memory_space<vmem>>) attributes {dimension_semantics = [#tpu.dimension_semantics<parallel>], iteration_bounds = array<i64: 1>, scalar_prefetch = 0 : i64, scratch_operands = 0 : i64, tpu.core_type = #tpu.core_type<tc>, window_params = [{transform_indices = @transform_0, window_bounds = array<i64: 2, 8, 32>}, {transform_indices = @transform_1, window_bounds = array<i64: 2, 8, 32>}, {transform_indices = @transform_2, window_bounds = array<i64: 2, 8, 32>}, {pipeline_mode = #tpu.pipeline_mode<synchronous>, transform_indices = @transform_3, window_bounds = array<i64: 64, 32>}, {pipeline_mode = #tpu.pipeline_mode<synchronous>, transform_indices = @transform_4, window_bounds = array<i64: 2, 32>}, {transform_indices = @transform_5, window_bounds = array<i64: 2, 8, 32>}, {transform_indices = @transform_6, window_bounds = array<i64: 2, 8, 8>}]} {
    %c0 = arith.constant 0 : index
    %c0_0 = arith.constant 0 : index
    %0 = vector.load %arg4[%c0, %c0_0] : memref<64x32xf32, #tpu.memory_space<vmem>>, vector<64x32xf32>
    %c0_1 = arith.constant 0 : index
    %c0_2 = arith.constant 0 : index
    %1 = vector.load %arg5[%c0_1, %c0_2] : memref<2x32xf32, #tpu.memory_space<vmem>>, vector<2x32xf32>
    %2 = vector.extract_strided_slice %0 {offsets = [0, 0], sizes = [32, 32], strides = [1, 1]} : vector<64x32xf32> to vector<32x32xf32>
    %3 = vector.extract_strided_slice %0 {offsets = [32, 0], sizes = [32, 32], strides = [1, 1]} : vector<64x32xf32> to vector<32x32xf32>
    %4 = vector.extract_strided_slice %1 {offsets = [0, 0], sizes = [1, 32], strides = [1, 1]} : vector<2x32xf32> to vector<1x32xf32>
    %5 = vector.extract_strided_slice %1 {offsets = [1, 0], sizes = [1, 32], strides = [1, 1]} : vector<2x32xf32> to vector<1x32xf32>
    %c0_3 = arith.constant 0 : index
    %c0_4 = arith.constant 0 : index
    %c0_5 = arith.constant 0 : index
    %6 = vector.load %arg1[%c0_3, %c0_4, %c0_5] : memref<2x8x32xf32, #tpu.memory_space<vmem>>, vector<2x8x32xf32>
    %7 = vector.shape_cast %6 : vector<2x8x32xf32> to vector<16x32xf32>
    %c0_6 = arith.constant 0 : index
    %c0_7 = arith.constant 0 : index
    %c0_8 = arith.constant 0 : index
    %8 = vector.load %arg2[%c0_6, %c0_7, %c0_8] : memref<2x8x32xf32, #tpu.memory_space<vmem>>, vector<2x8x32xf32>
    %9 = vector.shape_cast %8 : vector<2x8x32xf32> to vector<16x32xf32>
    %cst = arith.constant dense<0.000000e+00> : vector<16x32xf32>
    %10 = tpu.matmul %7, %2, %cst {dimension_numbers = #tpu.dot_dimension_numbers<[1], [0], [0], [1], [0, 0, 1, 1], [], []>} : vector<16x32xf32>, vector<32x32xf32>, vector<16x32xf32> -> vector<16x32xf32>
    %11 = vector.broadcast %4 : vector<1x32xf32> to vector<16x32xf32>
    %12 = arith.addf %10, %11 : vector<16x32xf32>
    %13 = vector.shape_cast %12 : vector<16x32xf32> to vector<2x8x32xf32>
    %cst_9 = arith.constant dense<0.000000e+00> : vector<16x32xf32>
    %14 = tpu.matmul %9, %3, %cst_9 {dimension_numbers = #tpu.dot_dimension_numbers<[1], [0], [0], [1], [0, 0, 1, 1], [], []>} : vector<16x32xf32>, vector<32x32xf32>, vector<16x32xf32> -> vector<16x32xf32>
    %15 = vector.broadcast %5 : vector<1x32xf32> to vector<16x32xf32>
    %16 = arith.addf %14, %15 : vector<16x32xf32>
    %17 = vector.shape_cast %16 : vector<16x32xf32> to vector<2x8x32xf32>
    "tpu.trace_start"() <{level = 10 : i32, message = "bqa,bka->bqk"}> : () -> ()
    %cst_10 = arith.constant dense<0.000000e+00> : vector<2x8x8xf32>
    %18 = tpu.matmul %13, %17, %cst_10 {dimension_numbers = #tpu.dot_dimension_numbers<[2], [2], [1], [1], [0, 0, 0, 1, 1, 1], [0], [0]>} : vector<2x8x32xf32>, vector<2x8x32xf32>, vector<2x8x8xf32> -> vector<2x8x8xf32>
    "tpu.trace_stop"() : () -> ()
    %cst_11 = arith.constant dense<0xFF800000> : vector<2x8xf32>
    %19 = vector.multi_reduction <maximumf>, %18, %cst_11 [2] : vector<2x8x8xf32> to vector<2x8xf32>
    %20 = vector.shape_cast %19 : vector<2x8xf32> to vector<2x8x1xf32>
    %21 = vector.broadcast %20 : vector<2x8x1xf32> to vector<2x8x8xf32>
    %22 = arith.subf %18, %21 : vector<2x8x8xf32>
    %23 = math.exp %22 : vector<2x8x8xf32>
    %cst_12 = arith.constant dense<0.000000e+00> : vector<2x8xf32>
    %24 = vector.multi_reduction <add>, %23, %cst_12 [2] : vector<2x8x8xf32> to vector<2x8xf32>
    %25 = vector.shape_cast %24 : vector<2x8xf32> to vector<2x8x1xf32>
    %26 = vector.broadcast %25 : vector<2x8x1xf32> to vector<2x8x8xf32>
    %27 = arith.divf %23, %26 : vector<2x8x8xf32>
    %c0_13 = arith.constant 0 : index
    %c0_14 = arith.constant 0 : index
    %c0_15 = arith.constant 0 : index
    %28 = vector.load %arg3[%c0_13, %c0_14, %c0_15] : memref<2x8x32xf32, #tpu.memory_space<vmem>>, vector<2x8x32xf32>
    "tpu.trace_start"() <{level = 10 : i32, message = "bqk,bkd->bqd"}> : () -> ()
    %cst_16 = arith.constant dense<0.000000e+00> : vector<2x8x32xf32>
    %29 = tpu.matmul %27, %28, %cst_16 {dimension_numbers = #tpu.dot_dimension_numbers<[2], [1], [1], [2], [0, 0, 0, 1, 1, 2], [0], [0]>} : vector<2x8x8xf32>, vector<2x8x32xf32>, vector<2x8x32xf32> -> vector<2x8x32xf32>
    "tpu.trace_stop"() : () -> ()
    %c0_17 = arith.constant 0 : index
    %c0_18 = arith.constant 0 : index
    %c0_19 = arith.constant 0 : index
    %30 = vector.load %arg6[%c0_17, %c0_18, %c0_19] : memref<2x8x32xf32, #tpu.memory_space<vmem>>, vector<2x8x32xf32>
    tpu.vector_store %arg6[%c0_17, %c0_18, %c0_19], %29 {strides = array<i32>} : memref<2x8x32xf32, #tpu.memory_space<vmem>>, vector<2x8x32xf32>,
    %c0_20 = arith.constant 0 : index
    %c0_21 = arith.constant 0 : index
    %c0_22 = arith.constant 0 : index
    %31 = vector.load %arg7[%c0_20, %c0_21, %c0_22] : memref<2x8x8xf32, #tpu.memory_space<vmem>>, vector<2x8x8xf32>
    tpu.vector_store %arg7[%c0_20, %c0_21, %c0_22], %27 {strides = array<i32>} : memref<2x8x8xf32, #tpu.memory_space<vmem>>, vector<2x8x8xf32>,
    return
  }
  func.func @transform_0(%arg0: i32) -> (i32, i32, i32) {
    %c0_i32 = arith.constant 0 : i32
    %c0_i32_0 = arith.constant 0 : i32
    %c0_i32_1 = arith.constant 0 : i32
    return %arg0, %c0_i32, %c0_i32_0 : i32, i32, i32
  }
  func.func @transform_1(%arg0: i32) -> (i32, i32, i32) {
    %c0_i32 = arith.constant 0 : i32
    %c0_i32_0 = arith.constant 0 : i32
    %c0_i32_1 = arith.constant 0 : i32
    return %arg0, %c0_i32, %c0_i32_0 : i32, i32, i32
  }
  func.func @transform_2(%arg0: i32) -> (i32, i32, i32) {
    %c0_i32 = arith.constant 0 : i32
    %c0_i32_0 = arith.constant 0 : i32
    %c0_i32_1 = arith.constant 0 : i32
    return %arg0, %c0_i32, %c0_i32_0 : i32, i32, i32
  }
  func.func @transform_3(%arg0: i32) -> (i32, i32) {
    %c0_i32 = arith.constant 0 : i32
    %c0_i32_0 = arith.constant 0 : i32
    %c0_i32_1 = arith.constant 0 : i32
    return %c0_i32, %c0_i32_0 : i32, i32
  }
  func.func @transform_4(%arg0: i32) -> (i32, i32) {
    %c0_i32 = arith.constant 0 : i32
    %c0_i32_0 = arith.constant 0 : i32
    %c0_i32_1 = arith.constant 0 : i32
    return %c0_i32, %c0_i32_0 : i32, i32
  }
  func.func @transform_5(%arg0: i32) -> (i32, i32, i32) {
    %c0_i32 = arith.constant 0 : i32
    %c0_i32_0 = arith.constant 0 : i32
    %c0_i32_1 = arith.constant 0 : i32
    return %arg0, %c0_i32, %c0_i32_0 : i32, i32, i32
  }
  func.func @transform_6(%arg0: i32) -> (i32, i32, i32) {
    %c0_i32 = arith.constant 0 : i32
    %c0_i32_0 = arith.constant 0 : i32
    %c0_i32_1 = arith.constant 0 : i32
    return %arg0, %c0_i32, %c0_i32_0 : i32, i32, i32
  }
}

</mosaic_0001>

<llo_original>
// kernel: mlp_attention.1
$region0: #{mlp_attention.1}
  #allocation0 [shape = 'u32[]', space=smem, size = 0x4, offset = 0x4, fixed_abs, tag = 'smem constant byte address 0x4 - core index']
  #allocation1 [shape = 'u32[144,128]{1,0:T(1,128)}', space=vmem, size = 0x12000, scoped, tag = 'internal scratch']
  %s0 = inlined_call_operand.vmem [shape: f32[2,8,32], index: 0, kind: input, shape index: {}]
  %s1 = inlined_call_operand.vmem [shape: f32[2,8,32], index: 1, kind: input, shape index: {}]
  %s2 = inlined_call_operand.vmem [shape: f32[2,8,32], index: 2, kind: input, shape index: {}]
  %s3 = inlined_call_operand.vmem [shape: f32[64,32], index: 3, kind: input, shape index: {}]
  %s4 = inlined_call_operand.vmem [shape: f32[2,32], index: 4, kind: input, shape index: {}]
  %s5 = inlined_call_operand.hbm [shape: f32[2,8,32], index: 5, kind: output, shape index: {0}]
  %s6 = inlined_call_operand.hbm [shape: f32[2,8,8], index: 6, kind: output, shape index: {1}]
  %7 = xla_tuple %s5, %s6
  %s8 = sld [smem:[#allocation0]]
  $region38: #{mlp_attention.1} parent=0
    _
  %s10 = ssub.s32 1, %s8
  %s11 = scalar_select 0, %s10, %s8
  $region1: #{mlp_attention.1} parent=0
    #allocation2 [shape = 'u8[8192]{0}', space=vmem, size = 0x2000, scoped, tag = 'output window, operand 0, single buffered']
    #allocation3 [shape = 's32[1]{0}', space=sflag, size = 0x4, scoped, tag = 'scoped memory for mlp_attention.1']
    #allocation4 [shape = 'u8[8192]{0}', space=vmem, size = 0x2000, scoped, tag = 'output window, operand 1, single buffered']
    #allocation5 [shape = 's32[1]{0}', space=sflag, size = 0x4, scoped, tag = 'scoped memory for mlp_attention.1']
    %12 = vsyncpa [#allocation3], 0
    %13 = vsyncpa [#allocation5], 0
    // Predicated region
    $region2: #{mlp_attention.1} parent=1 // pred_check
      _
    $region3: #{mlp_attention.1} parent=1 // pred_check_branch
      %15 = sbr.rel (0) target = $region5
    $region4: #{mlp_attention.1} parent=1 // pred_region
      _
    $region5: #{mlp_attention.1} parent=1 // pred_fallthru
      _
    // Predicated region
    $region6: #{mlp_attention.1} parent=1 // pred_check
      _
    $region7: #{mlp_attention.1} parent=1 // pred_check_branch
      %17 = sbr.rel (0) target = $region9
    $region8: #{mlp_attention.1} parent=1 // pred_region
      _
    $region9: #{mlp_attention.1} parent=1 // pred_fallthru
      _
    // Predicated region
    $region10: #{mlp_attention.1} parent=1 // pred_check
      _
    $region11: #{mlp_attention.1} parent=1 // pred_check_branch
      %19 = sbr.rel (0) target = $region13
    $region12: #{mlp_attention.1} parent=1 // pred_region
      _
    $region13: #{mlp_attention.1} parent=1 // pred_fallthru
      _
    // Predicated region
    $region14: #{mlp_attention.1} parent=1 // pred_check
      _
    $region15: #{mlp_attention.1} parent=1 // pred_check_branch
      %21 = sbr.rel (0) target = $region17
    $region16: #{mlp_attention.1} parent=1 // pred_region
      _
    $region17: #{mlp_attention.1} parent=1 // pred_fallthru
      _
    // Predicated region
    $region18: #{mlp_attention.1} parent=1 // pred_check
      _
    $region19: #{mlp_attention.1} parent=1 // pred_check_branch
      %23 = sbr.rel (0) target = $region21
    $region20: #{mlp_attention.1} parent=1 // pred_region
      _
    $region21: #{mlp_attention.1} parent=1 // pred_fallthru
      _
    %v24 = vld [vmem:[%s3] sm:$0xff]
    %v25 = vld [vmem:[%s3 + $0x8] sm:$0xff]
    %v26 = vld [vmem:[%s3 + $0x10] sm:$0xff]
    %v27 = vld [vmem:[%s3 + $0x18] sm:$0xff]
    %v28 = vld [vmem:[%s3 + $0x20] sm:$0xff]
    %v29 = vld [vmem:[%s3 + $0x28] sm:$0xff]
    %v30 = vld [vmem:[%s3 + $0x30] sm:$0xff]
    %v31 = vld [vmem:[%s3 + $0x38] sm:$0xff]
    %v32 = vld [vmem:[%s4] sm:$0x3]
    %v33 = vld [vmem:[%s0] sm:$0xff]
    %v34 = vld [vmem:[%s0 + $0x8] sm:$0xff]
    %v35 = vld [vmem:[%s1] sm:$0xff]
    %v36 = vld [vmem:[%s1 + $0x8] sm:$0xff]
    %v37 = vlaneseq
    %v38 = vshrl.u32 %v37, 7
    %v39 = vsub.s32 0, %v38
    %v40 = vrot.slane %v32, %v39
    %vm41 = vcmask 261120
    %v43 = vsel %vm41, %v33, 0
    %v46 = vsel %vm41, %v34, 0
    %48 = vmatprep.subr.mxu0 0.0
    %49 = vmatpush1.msra.mxu0 0.0
    %50 = vmatprep.subr.mxu0 0.0
    %51 = vmatpush1.msra.mxu0 0.0
    %52 = vmatprep.subr.mxu0 0.0
    %53 = vmatpush1.msra.mxu0 0.0
    %54 = vmatprep.subr.mxu0 0.0
    %55 = vmatpush1.msra.mxu0 0.0
    %56 = vmatprep.subr.mxu0 0.0
    %57 = vmatpush1.msra.mxu0 0.0
    %58 = vmatprep.subr.mxu0 0.0
    %59 = vmatpush1.msra.mxu0 0.0
    %60 = vmatprep.subr.mxu0 0.0
    %61 = vmatpush1.msra.mxu0 0.0
    %62 = vmatprep.subr.mxu0 0.0
    %63 = vmatpush1.msra.mxu0 0.0
    %64 = vmatprep.subr.mxu0 0.0
    %65 = vmatpush1.msra.mxu0 0.0
    %66 = vmatprep.subr.mxu0 0.0
    %67 = vmatpush1.msra.mxu0 0.0
    %68 = vmatprep.subr.mxu0 0.0
    %69 = vmatpush1.msra.mxu0 0.0
    %70 = vmatprep.subr.mxu0 0.0
    %71 = vmatpush1.msra.mxu0 0.0
    %72 = vmatprep.subr.mxu0 0.0
    %73 = vmatpush1.msra.mxu0 %v27
    %74 = vmatprep.subr.mxu0 0.0
    %75 = vmatpush1.msra.mxu0 %v26
    %76 = vmatprep.subr.mxu0 0.0
    %77 = vmatpush1.msra.mxu0 %v25
    %78 = vmatprep.subr.mxu0 0.0
    %79 = vmatpush1.msra.mxu0 %v24
    %80 = vmatprep.subr.mxu0 0.0
    %81 = vmatpush2.msra.mxu0 0.0
    %82 = vmatprep.subr.mxu0 0.0
    %83 = vmatpush2.msra.mxu0 0.0
    %84 = vmatprep.subr.mxu0 0.0
    %85 = vmatpush2.msra.mxu0 0.0
    %86 = vmatprep.subr.mxu0 0.0
    %87 = vmatpush2.msra.mxu0 0.0
    %88 = vmatprep.subr.mxu0 0.0
    %89 = vmatpush2.msra.mxu0 0.0
    %90 = vmatprep.subr.mxu0 0.0
    %91 = vmatpush2.msra.mxu0 0.0
    %92 = vmatprep.subr.mxu0 0.0
    %93 = vmatpush2.msra.mxu0 0.0
    %94 = vmatprep.subr.mxu0 0.0
    %95 = vmatpush2.msra.mxu0 0.0
    %96 = vmatprep.subr.mxu0 0.0
    %97 = vmatpush2.msra.mxu0 0.0
    %98 = vmatprep.subr.mxu0 0.0
    %99 = vmatpush2.msra.mxu0 0.0
    %100 = vmatprep.subr.mxu0 0.0
    %101 = vmatpush2.msra.mxu0 0.0
    %102 = vmatprep.subr.mxu0 0.0
    %103 = vmatpush2.msra.mxu0 0.0
    %104 = vmatprep.subr.mxu0 0.0
    %105 = vmatpush2.msra.mxu0 0.0
    %106 = vmatprep.subr.mxu0 0.0
    %107 = vmatpush2.msra.mxu0 0.0
    %108 = vmatprep.subr.mxu0 0.0
    %109 = vmatpush2.msra.mxu0 0.0
    %110 = vmatprep.subr.mxu0 0.0
    %111 = vmatpush2.msra.mxu0 0.0
    %112 = vmatprep.mubr.f32.mxu0 0.0
    %113 = vmatmul.mubr.f32.gmra.mxu0 %v43
    %v114 = vpop.f32.mrf.mxu0
    %v115 = vadd.f32 %v40, %v114
    %v116 = vpop.f32.mrf.mxu0
    %117 = vmatprep.mubr.f32.mxu0 0.0
    %118 = vmatmul.mubr.f32.gmra.mxu0 %v46
    %v119 = vpop.f32.mrf.mxu0
    %v120 = vadd.f32 %v40, %v119
    %v121 = vpop.f32.mrf.mxu0
    %122 = vdwg.mxu0
    %v123 = vlaneseq
    %v124 = vshrl.u32 %v123, 7
    %v125 = vsub.s32 1, %v124
    %v126 = vrot.slane %v32, %v125
    %v128 = vsel %vm41, %v35, 0
    %v131 = vsel %vm41, %v36, 0
    %133 = vmatprep.subr.mxu0 0.0
    %134 = vmatpush1.msra.mxu0 0.0
    %135 = vmatprep.subr.mxu0 0.0
    %136 = vmatpush1.msra.mxu0 0.0
    %137 = vmatprep.subr.mxu0 0.0
    %138 = vmatpush1.msra.mxu0 0.0
    %139 = vmatprep.subr.mxu0 0.0
    %140 = vmatpush1.msra.mxu0 0.0
    %141 = vmatprep.subr.mxu0 0.0
    %142 = vmatpush1.msra.mxu0 0.0
    %143 = vmatprep.subr.mxu0 0.0
    %144 = vmatpush1.msra.mxu0 0.0
    %145 = vmatprep.subr.mxu0 0.0
    %146 = vmatpush1.msra.mxu0 0.0
    %147 = vmatprep.subr.mxu0 0.0
    %148 = vmatpush1.msra.mxu0 0.0
    %149 = vmatprep.subr.mxu0 0.0
    %150 = vmatpush1.msra.mxu0 0.0
    %151 = vmatprep.subr.mxu0 0.0
    %152 = vmatpush1.msra.mxu0 0.0
    %153 = vmatprep.subr.mxu0 0.0
    %154 = vmatpush1.msra.mxu0 0.0
    %155 = vmatprep.subr.mxu0 0.0
    %156 = vmatpush1.msra.mxu0 0.0
    %157 = vmatprep.subr.mxu0 0.0
    %158 = vmatpush1.msra.mxu0 %v31
    %159 = vmatprep.subr.mxu0 0.0
    %160 = vmatpush1.msra.mxu0 %v30
    %161 = vmatprep.subr.mxu0 0.0
    %162 = vmatpush1.msra.mxu0 %v29
    %163 = vmatprep.subr.mxu0 0.0
    %164 = vmatpush1.msra.mxu0 %v28
    %165 = vmatprep.subr.mxu0 0.0
    %166 = vmatpush2.msra.mxu0 0.0
    %167 = vmatprep.subr.mxu0 0.0
    %168 = vmatpush2.msra.mxu0 0.0
    %169 = vmatprep.subr.mxu0 0.0
    %170 = vmatpush2.msra.mxu0 0.0
    %171 = vmatprep.subr.mxu0 0.0
    %172 = vmatpush2.msra.mxu0 0.0
    %173 = vmatprep.subr.mxu0 0.0
    %174 = vmatpush2.msra.mxu0 0.0
    %175 = vmatprep.subr.mxu0 0.0
    %176 = vmatpush2.msra.mxu0 0.0
    %177 = vmatprep.subr.mxu0 0.0
    %178 = vmatpush2.msra.mxu0 0.0
    %179 = vmatprep.subr.mxu0 0.0
    %180 = vmatpush2.msra.mxu0 0.0
    %181 = vmatprep.subr.mxu0 0.0
    %182 = vmatpush2.msra.mxu0 0.0
    %183 = vmatprep.subr.mxu0 0.0
    %184 = vmatpush2.msra.mxu0 0.0
    %185 = vmatprep.subr.mxu0 0.0
    %186 = vmatpush2.msra.mxu0 0.0
    %187 = vmatprep.subr.mxu0 0.0
    %188 = vmatpush2.msra.mxu0 0.0
    %189 = vmatprep.subr.mxu0 0.0
    %190 = vmatpush2.msra.mxu0 0.0
    %191 = vmatprep.subr.mxu0 0.0
    %192 = vmatpush2.msra.mxu0 0.0
    %193 = vmatprep.subr.mxu0 0.0
    %194 = vmatpush2.msra.mxu0 0.0
    %195 = vmatprep.subr.mxu0 0.0
    %196 = vmatpush2.msra.mxu0 0.0
    %197 = vmatprep.mubr.f32.mxu0 0.0
    %198 = vmatmul.mubr.f32.gmra.mxu0 %v128
    %v199 = vpop.f32.mrf.mxu0
    %v200 = vadd.f32 %v126, %v199
    %v201 = vpop.f32.mrf.mxu0
    %202 = vmatprep.mubr.f32.mxu0 0.0
    %203 = vmatmul.mubr.f32.gmra.mxu0 %v131
    %v204 = vpop.f32.mrf.mxu0
    %v205 = vadd.f32 %v126, %v204
    %v206 = vpop.f32.mrf.mxu0
    %207 = vdwg.mxu0
    %v209 = vsel %vm41, %v115, 0
    %v212 = vsel %vm41, %v200, 0
    %214 = vmatprep.subr.mxu0 0.0
    %215 = vmatpush1.xpose.msra.mxu0 0.0
    %216 = vmatprep.subr.mxu0 0.0
    %217 = vmatpush1.xpose.msra.mxu0 0.0
    %218 = vmatprep.subr.mxu0 0.0
    %219 = vmatpush1.xpose.msra.mxu0 0.0
    %220 = vmatprep.subr.mxu0 0.0
    %221 = vmatpush1.xpose.msra.mxu0 0.0
    %222 = vmatprep.subr.mxu0 0.0
    %223 = vmatpush1.xpose.msra.mxu0 0.0
    %224 = vmatprep.subr.mxu0 0.0
    %225 = vmatpush1.xpose.msra.mxu0 0.0
    %226 = vmatprep.subr.mxu0 0.0
    %227 = vmatpush1.xpose.msra.mxu0 0.0
    %228 = vmatprep.subr.mxu0 0.0
    %229 = vmatpush1.xpose.msra.mxu0 0.0
    %230 = vmatprep.subr.mxu0 0.0
    %231 = vmatpush1.xpose.msra.mxu0 0.0
    %232 = vmatprep.subr.mxu0 0.0
    %233 = vmatpush1.xpose.msra.mxu0 0.0
    %234 = vmatprep.subr.mxu0 0.0
    %235 = vmatpush1.xpose.msra.mxu0 0.0
    %236 = vmatprep.subr.mxu0 0.0
    %237 = vmatpush1.xpose.msra.mxu0 0.0
    %238 = vmatprep.subr.mxu0 0.0
    %239 = vmatpush1.xpose.msra.mxu0 0.0
    %240 = vmatprep.subr.mxu0 0.0
    %241 = vmatpush1.xpose.msra.mxu0 0.0
    %242 = vmatprep.subr.mxu0 0.0
    %243 = vmatpush1.xpose.msra.mxu0 0.0
    %244 = vmatprep.subr.mxu0 0.0
    %245 = vmatpush1.xpose.msra.mxu0 %v212
    %246 = vmatprep.subr.mxu0 0.0
    %247 = vmatpush2.xpose.msra.mxu0 0.0
    %248 = vmatprep.subr.mxu0 0.0
    %249 = vmatpush2.xpose.msra.mxu0 0.0
    %250 = vmatprep.subr.mxu0 0.0
    %251 = vmatpush2.xpose.msra.mxu0 0.0
    %252 = vmatprep.subr.mxu0 0.0
    %253 = vmatpush2.xpose.msra.mxu0 0.0
    %254 = vmatprep.subr.mxu0 0.0
    %255 = vmatpush2.xpose.msra.mxu0 0.0
    %256 = vmatprep.subr.mxu0 0.0
    %257 = vmatpush2.xpose.msra.mxu0 0.0
    %258 = vmatprep.subr.mxu0 0.0
    %259 = vmatpush2.xpose.msra.mxu0 0.0
    %260 = vmatprep.subr.mxu0 0.0
    %261 = vmatpush2.xpose.msra.mxu0 0.0
    %262 = vmatprep.subr.mxu0 0.0
    %263 = vmatpush2.xpose.msra.mxu0 0.0
    %264 = vmatprep.subr.mxu0 0.0
    %265 = vmatpush2.xpose.msra.mxu0 0.0
    %266 = vmatprep.subr.mxu0 0.0
    %267 = vmatpush2.xpose.msra.mxu0 0.0
    %268 = vmatprep.subr.mxu0 0.0
    %269 = vmatpush2.xpose.msra.mxu0 0.0
    %270 = vmatprep.subr.mxu0 0.0
    %271 = vmatpush2.xpose.msra.mxu0 0.0
    %272 = vmatprep.subr.mxu0 0.0
    %273 = vmatpush2.xpose.msra.mxu0 0.0
    %274 = vmatprep.subr.mxu0 0.0
    %275 = vmatpush2.xpose.msra.mxu0 0.0
    %276 = vmatprep.subr.mxu0 0.0
    %277 = vmatpush2.xpose.msra.mxu0 0.0
    %278 = vmatprep.mubr.f32.mxu0 0.0
    %279 = vmatmul.mubr.f32.gmra.mxu0 %v209
    %v280 = vpop.f32.mrf.mxu0
    %v281 = vadd.f32 0.0, %v280
    %v282 = vpop.f32.mrf.mxu0
    %283 = vdwg.mxu0
    %v285 = vsel %vm41, %v120, 0
    %v288 = vsel %vm41, %v205, 0
    %290 = vmatprep.subr.mxu0 0.0
    %291 = vmatpush1.xpose.msra.mxu0 0.0
    %292 = vmatprep.subr.mxu0 0.0
    %293 = vmatpush1.xpose.msra.mxu0 0.0
    %294 = vmatprep.subr.mxu0 0.0
    %295 = vmatpush1.xpose.msra.mxu0 0.0
    %296 = vmatprep.subr.mxu0 0.0
    %297 = vmatpush1.xpose.msra.mxu0 0.0
    %298 = vmatprep.subr.mxu0 0.0
    %299 = vmatpush1.xpose.msra.mxu0 0.0
    %300 = vmatprep.subr.mxu0 0.0
    %301 = vmatpush1.xpose.msra.mxu0 0.0
    %302 = vmatprep.subr.mxu0 0.0
    %303 = vmatpush1.xpose.msra.mxu0 0.0
    %304 = vmatprep.subr.mxu0 0.0
    %305 = vmatpush1.xpose.msra.mxu0 0.0
    %306 = vmatprep.subr.mxu0 0.0
    %307 = vmatpush1.xpose.msra.mxu0 0.0
    %308 = vmatprep.subr.mxu0 0.0
    %309 = vmatpush1.xpose.msra.mxu0 0.0
    %310 = vmatprep.subr.mxu0 0.0
    %311 = vmatpush1.xpose.msra.mxu0 0.0
    %312 = vmatprep.subr.mxu0 0.0
    %313 = vmatpush1.xpose.msra.mxu0 0.0
    %314 = vmatprep.subr.mxu0 0.0
    %315 = vmatpush1.xpose.msra.mxu0 0.0
    %316 = vmatprep.subr.mxu0 0.0
    %317 = vmatpush1.xpose.msra.mxu0 0.0
    %318 = vmatprep.subr.mxu0 0.0
    %319 = vmatpush1.xpose.msra.mxu0 0.0
    %320 = vmatprep.subr.mxu0 0.0
    %321 = vmatpush1.xpose.msra.mxu0 %v288
    %322 = vmatprep.subr.mxu0 0.0
    %323 = vmatpush2.xpose.msra.mxu0 0.0
    %324 = vmatprep.subr.mxu0 0.0
    %325 = vmatpush2.xpose.msra.mxu0 0.0
    %326 = vmatprep.subr.mxu0 0.0
    %327 = vmatpush2.xpose.msra.mxu0 0.0
    %328 = vmatprep.subr.mxu0 0.0
    %329 = vmatpush2.xpose.msra.mxu0 0.0
    %330 = vmatprep.subr.mxu0 0.0
    %331 = vmatpush2.xpose.msra.mxu0 0.0
    %332 = vmatprep.subr.mxu0 0.0
    %333 = vmatpush2.xpose.msra.mxu0 0.0
    %334 = vmatprep.subr.mxu0 0.0
    %335 = vmatpush2.xpose.msra.mxu0 0.0
    %336 = vmatprep.subr.mxu0 0.0
    %337 = vmatpush2.xpose.msra.mxu0 0.0
    %338 = vmatprep.subr.mxu0 0.0
    %339 = vmatpush2.xpose.msra.mxu0 0.0
    %340 = vmatprep.subr.mxu0 0.0
    %341 = vmatpush2.xpose.msra.mxu0 0.0
    %342 = vmatprep.subr.mxu0 0.0
    %343 = vmatpush2.xpose.msra.mxu0 0.0
    %344 = vmatprep.subr.mxu0 0.0
    %345 = vmatpush2.xpose.msra.mxu0 0.0
    %346 = vmatprep.subr.mxu0 0.0
    %347 = vmatpush2.xpose.msra.mxu0 0.0
    %348 = vmatprep.subr.mxu0 0.0
    %349 = vmatpush2.xpose.msra.mxu0 0.0
    %350 = vmatprep.subr.mxu0 0.0
    %351 = vmatpush2.xpose.msra.mxu0 0.0
    %352 = vmatprep.subr.mxu0 0.0
    %353 = vmatpush2.xpose.msra.mxu0 0.0
    %354 = vmatprep.mubr.f32.mxu0 0.0
    %355 = vmatmul.mubr.f32.gmra.mxu0 %v285
    %v356 = vpop.f32.mrf.mxu0
    %v357 = vadd.f32 0.0, %v356
    %v358 = vpop.f32.mrf.mxu0
    %359 = vdwg.mxu0
    %vm360 = vcmask 64512
    %v361 = vsel %vm360, %v281, -inf
    %362 = vmax.xlane.f32.xlu0 %v361
    %v363 = vpop.xlane.xlu0 %362
    %v364 = vsel %vm360, %v357, -inf
    %365 = vmax.xlane.f32.xlu0 %v364
    %v366 = vpop.xlane.xlu0 %365
    %v367 = vsub.f32 %v281, %v363
    %v368 = vsub.f32 %v357, %v366
    %v369 = vmul.f32 %v367, 1.442695
    %v370 = vpow.pop %v369
    %v371 = vmul.f32 %v368, 1.442695
    %v372 = vpow.pop %v371
    %v373 = vsel %vm360, %v370, 0.0
    %374 = vadd.xlane.f32.xlu0 %v373
    %v375 = vpop.xlane.xlu0 %374
    %v376 = vsel %vm360, %v372, 0.0
    %377 = vadd.xlane.f32.xlu0 %v376
    %v378 = vpop.xlane.xlu0 %377
    %v379 = vrcp.pop %v375
    %v380 = vmul.f32 %v370, %v379
    %v381 = vrcp.pop %v378
    %v382 = vmul.f32 %v372, %v381
    %v383 = vld [vmem:[%s2] sm:$0xff]
    %v384 = vld [vmem:[%s2 + $0x8] sm:$0xff]
    %v386 = vsel %vm360, %v380, 0
    %388 = vmatprep.subr.mxu0 0.0
    %389 = vmatpush1.msra.mxu0 0.0
    %390 = vmatprep.subr.mxu0 0.0
    %391 = vmatpush1.msra.mxu0 0.0
    %392 = vmatprep.subr.mxu0 0.0
    %393 = vmatpush1.msra.mxu0 0.0
    %394 = vmatprep.subr.mxu0 0.0
    %395 = vmatpush1.msra.mxu0 0.0
    %396 = vmatprep.subr.mxu0 0.0
    %397 = vmatpush1.msra.mxu0 0.0
    %398 = vmatprep.subr.mxu0 0.0
    %399 = vmatpush1.msra.mxu0 0.0
    %400 = vmatprep.subr.mxu0 0.0
    %401 = vmatpush1.msra.mxu0 0.0
    %402 = vmatprep.subr.mxu0 0.0
    %403 = vmatpush1.msra.mxu0 0.0
    %404 = vmatprep.subr.mxu0 0.0
    %405 = vmatpush1.msra.mxu0 0.0
    %406 = vmatprep.subr.mxu0 0.0
    %407 = vmatpush1.msra.mxu0 0.0
    %408 = vmatprep.subr.mxu0 0.0
    %409 = vmatpush1.msra.mxu0 0.0
    %410 = vmatprep.subr.mxu0 0.0
    %411 = vmatpush1.msra.mxu0 0.0
    %412 = vmatprep.subr.mxu0 0.0
    %413 = vmatpush1.msra.mxu0 0.0
    %414 = vmatprep.subr.mxu0 0.0
    %415 = vmatpush1.msra.mxu0 0.0
    %416 = vmatprep.subr.mxu0 0.0
    %417 = vmatpush1.msra.mxu0 0.0
    %418 = vmatprep.subr.mxu0 0.0
    %419 = vmatpush1.msra.mxu0 %v383
    %420 = vmatprep.subr.mxu0 0.0
    %421 = vmatpush2.msra.mxu0 0.0
    %422 = vmatprep.subr.mxu0 0.0
    %423 = vmatpush2.msra.mxu0 0.0
    %424 = vmatprep.subr.mxu0 0.0
    %425 = vmatpush2.msra.mxu0 0.0
    %426 = vmatprep.subr.mxu0 0.0
    %427 = vmatpush2.msra.mxu0 0.0
    %428 = vmatprep.subr.mxu0 0.0
    %429 = vmatpush2.msra.mxu0 0.0
    %430 = vmatprep.subr.mxu0 0.0
    %431 = vmatpush2.msra.mxu0 0.0
    %432 = vmatprep.subr.mxu0 0.0
    %433 = vmatpush2.msra.mxu0 0.0
    %434 = vmatprep.subr.mxu0 0.0
    %435 = vmatpush2.msra.mxu0 0.0
    %436 = vmatprep.subr.mxu0 0.0
    %437 = vmatpush2.msra.mxu0 0.0
    %438 = vmatprep.subr.mxu0 0.0
    %439 = vmatpush2.msra.mxu0 0.0
    %440 = vmatprep.subr.mxu0 0.0
    %441 = vmatpush2.msra.mxu0 0.0
    %442 = vmatprep.subr.mxu0 0.0
    %443 = vmatpush2.msra.mxu0 0.0
    %444 = vmatprep.subr.mxu0 0.0
    %445 = vmatpush2.msra.mxu0 0.0
    %446 = vmatprep.subr.mxu0 0.0
    %447 = vmatpush2.msra.mxu0 0.0
    %448 = vmatprep.subr.mxu0 0.0
    %449 = vmatpush2.msra.mxu0 0.0
    %450 = vmatprep.subr.mxu0 0.0
    %451 = vmatpush2.msra.mxu0 0.0
    %452 = vmatprep.mubr.f32.mxu0 0.0
    %453 = vmatmul.mubr.f32.gmra.mxu0 %v386
    %v454 = vpop.f32.mrf.mxu0
    %v455 = vadd.f32 0.0, %v454
    %v456 = vpop.f32.mrf.mxu0
    %457 = vdwg.mxu0
    %v459 = vsel %vm360, %v382, 0
    %461 = vmatprep.subr.mxu0 0.0
    %462 = vmatpush1.msra.mxu0 0.0
    %463 = vmatprep.subr.mxu0 0.0
    %464 = vmatpush1.msra.mxu0 0.0
    %465 = vmatprep.subr.mxu0 0.0
    %466 = vmatpush1.msra.mxu0 0.0
    %467 = vmatprep.subr.mxu0 0.0
    %468 = vmatpush1.msra.mxu0 0.0
    %469 = vmatprep.subr.mxu0 0.0
    %470 = vmatpush1.msra.mxu0 0.0
    %471 = vmatprep.subr.mxu0 0.0
    %472 = vmatpush1.msra.mxu0 0.0
    %473 = vmatprep.subr.mxu0 0.0
    %474 = vmatpush1.msra.mxu0 0.0
    %475 = vmatprep.subr.mxu0 0.0
    %476 = vmatpush1.msra.mxu0 0.0
    %477 = vmatprep.subr.mxu0 0.0
    %478 = vmatpush1.msra.mxu0 0.0
    %479 = vmatprep.subr.mxu0 0.0
    %480 = vmatpush1.msra.mxu0 0.0
    %481 = vmatprep.subr.mxu0 0.0
    %482 = vmatpush1.msra.mxu0 0.0
    %483 = vmatprep.subr.mxu0 0.0
    %484 = vmatpush1.msra.mxu0 0.0
    %485 = vmatprep.subr.mxu0 0.0
    %486 = vmatpush1.msra.mxu0 0.0
    %487 = vmatprep.subr.mxu0 0.0
    %488 = vmatpush1.msra.mxu0 0.0
    %489 = vmatprep.subr.mxu0 0.0
    %490 = vmatpush1.msra.mxu0 0.0
    %491 = vmatprep.subr.mxu0 0.0
    %492 = vmatpush1.msra.mxu0 %v384
    %493 = vmatprep.subr.mxu0 0.0
    %494 = vmatpush2.msra.mxu0 0.0
    %495 = vmatprep.subr.mxu0 0.0
    %496 = vmatpush2.msra.mxu0 0.0
    %497 = vmatprep.subr.mxu0 0.0
    %498 = vmatpush2.msra.mxu0 0.0
    %499 = vmatprep.subr.mxu0 0.0
    %500 = vmatpush2.msra.mxu0 0.0
    %501 = vmatprep.subr.mxu0 0.0
    %502 = vmatpush2.msra.mxu0 0.0
    %503 = vmatprep.subr.mxu0 0.0
    %504 = vmatpush2.msra.mxu0 0.0
    %505 = vmatprep.subr.mxu0 0.0
    %506 = vmatpush2.msra.mxu0 0.0
    %507 = vmatprep.subr.mxu0 0.0
    %508 = vmatpush2.msra.mxu0 0.0
    %509 = vmatprep.subr.mxu0 0.0
    %510 = vmatpush2.msra.mxu0 0.0
    %511 = vmatprep.subr.mxu0 0.0
    %512 = vmatpush2.msra.mxu0 0.0
    %513 = vmatprep.subr.mxu0 0.0
    %514 = vmatpush2.msra.mxu0 0.0
    %515 = vmatprep.subr.mxu0 0.0
    %516 = vmatpush2.msra.mxu0 0.0
    %517 = vmatprep.subr.mxu0 0.0
    %518 = vmatpush2.msra.mxu0 0.0
    %519 = vmatprep.subr.mxu0 0.0
    %520 = vmatpush2.msra.mxu0 0.0
    %521 = vmatprep.subr.mxu0 0.0
    %522 = vmatpush2.msra.mxu0 0.0
    %523 = vmatprep.subr.mxu0 0.0
    %524 = vmatpush2.msra.mxu0 0.0
    %525 = vmatprep.mubr.f32.mxu0 0.0
    %526 = vmatmul.mubr.f32.gmra.mxu0 %v459
    %v527 = vpop.f32.mrf.mxu0
    %v528 = vadd.f32 0.0, %v527
    %v529 = vpop.f32.mrf.mxu0
    %530 = vdwg.mxu0
    %531 = vst.msk [vmem:[#allocation2] sm:$0xff] %vm41, %v455
    %532 = vst.msk [vmem:[#allocation2 + $0x8] sm:$0xff] %vm41, %v528
    %533 = vst.msk [vmem:[#allocation4] sm:$0xff] %vm360, %v380
    %534 = vst.msk [vmem:[#allocation4 + $0x8] sm:$0xff] %vm360, %v382
    // Predicated region
    $region22: #{mlp_attention.1} parent=1 // pred_check
      _
    $region23: #{mlp_attention.1} parent=1 // pred_check_branch
      %536 = sbr.rel (0) target = $region25
    $region24: #{mlp_attention.1} parent=1 // pred_region
      %s538 = ssub.s32 256, 256
      %539 = vsyncadd [#allocation3], %s538
      %s540 = sshll.u32 [#allocation2], 4
      %s541 = int_to_ptr.vmem [resolvable:$true] %s540
      %546 = dma.vmem_to_hbm [thread:$0]  %s541, 256, %s5, [#allocation3], 128, 128, 8
    $region25: #{mlp_attention.1} parent=1 // pred_fallthru
      _
    // Predicated region
    $region26: #{mlp_attention.1} parent=1 // pred_check
      _
    $region27: #{mlp_attention.1} parent=1 // pred_check_branch
      %548 = sbr.rel (0) target = $region29
    $region28: #{mlp_attention.1} parent=1 // pred_region
      %s550 = ssub.s32 256, 256
      %551 = vsyncadd [#allocation5], %s550
      %s552 = sshll.u32 [#allocation4], 4
      %s553 = int_to_ptr.vmem [resolvable:$true] %s552
      %558 = dma.vmem_to_hbm [thread:$0]  %s553, 256, %s6, [#allocation5], 128, 128, 8
    $region29: #{mlp_attention.1} parent=1 // pred_fallthru
      _
    // Predicated region
    $region30: #{mlp_attention.1} parent=1 // pred_check
      _
    $region31: #{mlp_attention.1} parent=1 // pred_check_branch
      %560 = sbr.rel (0) target = $region33
    $region32: #{mlp_attention.1} parent=1 // pred_region
      %561 = dma.done [#allocation3], 256
    $region33: #{mlp_attention.1} parent=1 // pred_fallthru
      _
    // Predicated region
    $region34: #{mlp_attention.1} parent=1 // pred_check
      _
    $region35: #{mlp_attention.1} parent=1 // pred_check_branch
      %563 = sbr.rel (0) target = $region37
    $region36: #{mlp_attention.1} parent=1 // pred_region
      %564 = dma.done [#allocation5], 256
    $region37: #{mlp_attention.1} parent=1 // pred_fallthru
      _
    %565 = vsyncpa [#allocation3], 1
    %566 = vsyncpa [#allocation5], 1

</llo_original>
